<compile_context>
chip_gen: v6e
topology: v6e:2x2x1
jax: 0.10.0
libtpu: 0.0.40
codegen_flags: <defaults>
</compile_context>

<pallas_src>
import functools

import jax
import jax.numpy as jnp
from jax import lax
from jax.experimental import pallas as pl
from jax.experimental.pallas import tpu as pltpu

# Deterministic stand-ins for the script-level globals `cat_mean` / `cat_std`
# used by the PyTorch module (only index 2 matters for the forward pass).
CAT_MEAN = (0.10, 0.20, 0.50, 0.30)
CAT_STD = (1.00, 1.00, 0.80, 1.00)

LN10 = 2.302585092994046

_FOLD = 8                    # batch fold factor: each feature fills 8 sublanes
_CHUNK_W = 512               # lanes per inner-loop chunk (4 vregs per 8-row slab)
_DEFAULT_TILE_N = 16 * 1024  # lanes per grid step: 104 rows * 16K * 4B ~= 6.5 MiB


def _round_up(x: int, m: int) -> int:
    return ((x + m - 1) // m) * m


def _static_pow(x, p):
    """x ** p specialised at trace time (avoids log+exp on the EUP when possible)."""
    p = float(p)
    if p == 0.0:
        return jnp.ones_like(x)
    if p > 0 and p == round(p) and p <= 16:
        acc = x
        for _ in range(int(round(p)) - 1):
            acc = acc * x
        return acc
    if p > 0 and 2.0 * p == round(2.0 * p) and p <= 16:
        acc = jnp.sqrt(x)          # NaN for x < 0, same as pow(negative, fractional)
        for _ in range(int(p)):
            acc = acc * x
        return acc
    return jnp.power(x, p)


def _loss_kernel(data_ref, z_ref, out_ref, *, exponent, cat_mean2, cat_std2,
                 c_feat, n_chunks):
    """data_ref: (n_chunks, 3*C*8, 512); z_ref: (n_chunks, 8, 512);
    out_ref: (1, 8, 512) resident partial-sum block."""
    i = pl.program_id(1)

    @pl.when(i == 0)
    def _init():
        out_ref[...] = jnp.zeros_like(out_ref)

    rows_per_stream = c_feat * _FOLD

    def chunk_contribution(k):
        z = z_ref[k]                                          # (8, CW)
        w = _static_pow(1.0 - z, exponent) + 0.05             # (8, CW)

        total = None
        for f in range(c_feat):
            r0 = f * _FOLD
            p = data_ref[k, r0:r0 + _FOLD, :]
            t = data_ref[k, rows_per_stream + r0:rows_per_stream + r0 + _FOLD, :]
            e = data_ref[k, 2 * rows_per_stream + r0:2 * rows_per_stream + r0 + _FOLD, :]
            if f == 2:
                # 10**x de-normalisation, only on the feature-2 rows.
                # (The intermediate `err *= cat_std[2]` in the PyTorch code is
                #  overwritten by the next line, so it has no effect.)
                p = jnp.exp((p * cat_std2 + cat_mean2) * LN10)
                t = jnp.exp((t * cat_std2 + cat_mean2) * LN10)
                e = jnp.abs(e * LN10 * t)
            d = p - t
            v = d * d / e
            total = v if total is None else total + v
        return w * total                                      # (8, CW)

    def body(k, acc):
        return acc + chunk_contribution(k)

    partial = lax.fori_loop(0, n_chunks, body,
                            jnp.zeros((_FOLD, _CHUNK_W), jnp.float32))
    out_ref[...] += partial[None, :, :]


def _fold3(x2d, n_pad, chunks_total, fill):
    """(n, c) -> (chunks_total, c*8, 512), feature-major fold.
    out[q, f*8 + s, l] == x_padded[s*nf + q*512 + l, f]."""
    n, c = x2d.shape
    xp = jnp.pad(x2d.astype(jnp.float32), ((0, n_pad - n), (0, 0)),
                 constant_values=fill)
    xp = xp.reshape(_FOLD, chunks_total, _CHUNK_W, c)
    xp = jnp.transpose(xp, (1, 3, 0, 2))                      # (chunks, c, 8, CW)
    return xp.reshape(chunks_total, c * _FOLD, _CHUNK_W)


def _fold_z(z, n_pad, chunks_total):
    """(n, 1) or (n,) -> (chunks_total, 8, 512); rows align with the data fold."""
    z = z.reshape(-1).astype(jnp.float32)
    z = jnp.pad(z, (0, n_pad - z.shape[0]), constant_values=0.0)
    z = z.reshape(_FOLD, chunks_total, _CHUNK_W)
    return jnp.transpose(z, (1, 0, 2))


@functools.partial(jax.jit, static_argnames=("exponent", "tile_n", "splits"))
def weighted_custom_exp_z_loss(preds, targets, target_err, target_z, *,
                               exponent: float,
                               tile_n: int | None = None,
                               splits: int | None = None):
    n, c = preds.shape
    assert c >= 3, "the module de-normalises column 2; need at least 3 columns"

    nf_needed = -(-n // _FOLD)                    # columns needed after the 8-fold
    if tile_n is None:
        tile_n = _DEFAULT_TILE_N
    tile_n = max(_CHUNK_W, _round_up(int(tile_n), _CHUNK_W))
    tile_n = min(tile_n, _round_up(nf_needed, _CHUNK_W))
    if splits is None:
        splits = 2 if nf_needed >= 2 * tile_n else 1

    nf = _round_up(nf_needed, splits * tile_n)    # folded columns (padded)
    n_pad = _FOLD * nf                            # padded batch size
    chunks_total = nf // _CHUNK_W
    cps = tile_n // _CHUNK_W                      # chunks per grid step
    t_per = chunks_total // (splits * cps)        # inner grid steps per split

    rows = 3 * c * _FOLD                          # stacked preds|targets|err rows

    # Padding invariant (required for the mask-free kernel): preds/targets/z -> 0,
    # err -> 1  =>  every padded element contributes exactly 0 to the sum.
    data3 = jnp.concatenate(
        [_fold3(preds, n_pad, chunks_total, 0.0),
         _fold3(targets, n_pad, chunks_total, 0.0),
         _fold3(target_err, n_pad, chunks_total, 1.0)], axis=1)   # (chunks, rows, 512)
    z3 = _fold_z(target_z, n_pad, chunks_total)                   # (chunks, 8, 512)

    kernel = functools.partial(
        _loss_kernel,
        exponent=float(exponent),
        cat_mean2=float(CAT_MEAN[2]),
        cat_std2=float(CAT_STD[2]),
        c_feat=int(c),
        n_chunks=int(cps),
    )

    # Explicit VMEM budget: 2 double-buffered input blocks + the tiny output block.
    vmem_needed = 2 * (rows + _FOLD) * tile_n * 4 + 2 * _FOLD * _CHUNK_W * 4
    vmem_limit = int(min(max(vmem_needed + (8 << 20), 32 << 20), 128 << 20))

    partials = pl.pallas_call(
        kernel,
        out_shape=jax.ShapeDtypeStruct((splits, _FOLD, _CHUNK_W), jnp.float32),
        grid_spec=pltpu.PrefetchScalarGridSpec(
            num_scalar_prefetch=0,
            grid=(splits, t_per),
            in_specs=[
                pl.BlockSpec((cps, rows, _CHUNK_W),
                             lambda s, i, t=t_per: (s * t + i, 0, 0)),
                pl.BlockSpec((cps, _FOLD, _CHUNK_W),
                             lambda s, i, t=t_per: (s * t + i, 0, 0)),
            ],
            out_specs=pl.BlockSpec((1, _FOLD, _CHUNK_W), lambda s, i: (s, 0, 0)),
        ),
        compiler_params=pltpu.CompilerParams(
            dimension_semantics=("parallel", "arbitrary"),
            vmem_limit_bytes=vmem_limit),
        cost_estimate=pl.CostEstimate(
            flops=int(14 * n * c),
            transcendentals=int(3 * n),
            bytes_accessed=int((3 * n * c + n) * 4 + splits * _FOLD * _CHUNK_W * 4)),
    )(data3, z3)

    # Tiny final reduction (a few KiB) + normalisation by the true element count.
    return jnp.sum(partials) * (1.0 / float(n * c))


def _reference(preds, targets, target_err, target_z, exponent):
    """Pure-JAX reference mirroring the PyTorch forward."""
    col2 = jnp.arange(preds.shape[1])[None, :] == 2
    preds_t = jnp.where(col2, 10.0 ** (preds * CAT_STD[2] + CAT_MEAN[2]), preds)
    targets_t = jnp.where(col2, 10.0 ** (targets * CAT_STD[2] + CAT_MEAN[2]), targets)
    err_t = jnp.where(col2, jnp.abs(target_err * LN10 * targets_t), target_err)
    z_weight = (1.0 - target_z) ** exponent + 0.05
    return jnp.mean(z_weight * (preds_t - targets_t) ** 2 / err_t)


if __name__ == "__main__":
    C = 4
    exponent = 2.5

    def make_inputs(key, n):
        k1, k2, k3, k4 = jax.random.split(key, 4)
        preds = jax.random.normal(k1, (n, C), dtype=jnp.float32) * 0.5
        targets = jax.random.normal(k2, (n, C), dtype=jnp.float32) * 0.5
        target_err = jax.random.uniform(k3, (n, C), dtype=jnp.float32,
                                        minval=0.1, maxval=1.0)
        target_z = jax.random.uniform(k4, (n, 1), dtype=jnp.float32,
                                      minval=0.0, maxval=0.9)
        return preds, targets, target_err, target_z

    def check(args, **kw):
        loss = jax.block_until_ready(
            weighted_custom_exp_z_loss(*args, exponent=exponent, **kw))
        ref = _reference(*args, exponent)
        assert jnp.allclose(loss, ref, rtol=5e-4, atol=1e-6), (float(loss), float(ref))

    # Tiny case: single chunk, single grid step.
    check(make_inputs(jax.random.PRNGKey(0), 8))
    # Batch not a multiple of 8: exercises fold padding inside a tile.
    check(make_inputs(jax.random.PRNGKey(1), 300))
    # Larger batch: multi-chunk inner fori_loop with the default tile size.
    args = make_inputs(jax.random.PRNGKey(2), 20000)
    check(args)
    # Multi-step grid + explicit 2-way core split (accumulator reset / padding).
    check(args, tile_n=1024, splits=2)

    print("KERNEL_OK")
</pallas_src>

<mosaic_0001>
module attributes {stable_mosaic.version = 11 : i64} {
  func.func @_loss_kernel(%arg0: i32, %arg1: i32, %arg2: memref<1x96x512xf32, #tpu.memory_space<vmem>>, %arg3: memref<1x8x512xf32, #tpu.memory_space<vmem>>, %arg4: memref<1x8x512xf32, #tpu.memory_space<vmem>>) attributes {dimension_semantics = [#tpu.dimension_semantics<parallel>, #tpu.dimension_semantics<arbitrary>], iteration_bounds = array<i64: 1, 1>, scalar_prefetch = 0 : i64, scratch_operands = 0 : i64, tpu.core_type = #tpu.core_type<tc>, window_params = [{transform_indices = @transform_0, window_bounds = array<i64: 1, 96, 512>}, {transform_indices = @transform_1, window_bounds = array<i64: 1, 8, 512>}, {transform_indices = @transform_2, window_bounds = array<i64: 1, 8, 512>}]} {
    %c0_i32 = arith.constant 0 : i32
    %0 = arith.cmpi eq, %arg1, %c0_i32 : i32
    %1 = arith.extui %0 : i1 to i32
    %c0_i32_0 = arith.constant 0 : i32
    %2 = arith.cmpi ne, %1, %c0_i32_0 : i32
    scf.if %2 {
      %cst_31 = arith.constant 0.000000e+00 : f32
      %89 = vector.broadcast %cst_31 : f32 to vector<1x8x512xf32>
      %c0_32 = arith.constant 0 : index
      %c0_33 = arith.constant 0 : index
      %c0_34 = arith.constant 0 : index
      %90 = vector.load %arg4[%c0_32, %c0_33, %c0_34] : memref<1x8x512xf32, #tpu.memory_space<vmem>>, vector<1x8x512xf32>
      tpu.vector_store %arg4[%c0_32, %c0_33, %c0_34], %89 {strides = array<i32>} : memref<1x8x512xf32, #tpu.memory_space<vmem>>, vector<1x8x512xf32>,
    } else {
    }
    %cst = arith.constant 0.000000e+00 : f32
    %3 = vector.broadcast %cst : f32 to vector<8x512xf32>
    %c0_i32_1 = arith.constant 0 : i32
    %4 = arith.index_cast %c0_i32_1 : i32 to index
    %c0 = arith.constant 0 : index
    %c0_2 = arith.constant 0 : index
    %5 = vector.load %arg3[%4, %c0, %c0_2] : memref<1x8x512xf32, #tpu.memory_space<vmem>>, vector<1x8x512xf32>
    %6 = vector.shape_cast %5 : vector<1x8x512xf32> to vector<8x512xf32>
    %cst_3 = arith.constant 1.000000e+00 : f32
    %7 = vector.broadcast %cst_3 : f32 to vector<8x512xf32>
    %8 = arith.subf %7, %6 : vector<8x512xf32>
    %9 = math.sqrt %8 : vector<8x512xf32>
    %10 = arith.mulf %9, %8 : vector<8x512xf32>
    %11 = arith.mulf %10, %8 : vector<8x512xf32>
    %cst_4 = arith.constant 5.000000e-02 : f32
    %12 = vector.broadcast %cst_4 : f32 to vector<8x512xf32>
    %13 = arith.addf %11, %12 : vector<8x512xf32>
    %14 = arith.index_cast %c0_i32_1 : i32 to index
    %c0_5 = arith.constant 0 : index
    %c0_6 = arith.constant 0 : index
    %15 = vector.load %arg2[%14, %c0_5, %c0_6] : memref<1x96x512xf32, #tpu.memory_space<vmem>>, vector<1x8x512xf32>
    %16 = vector.shape_cast %15 : vector<1x8x512xf32> to vector<8x512xf32>
    %17 = arith.index_cast %c0_i32_1 : i32 to index
    %c32 = arith.constant 32 : index
    %c0_7 = arith.constant 0 : index
    %18 = vector.load %arg2[%17, %c32, %c0_7] : memref<1x96x512xf32, #tpu.memory_space<vmem>>, vector<1x8x512xf32>
    %19 = vector.shape_cast %18 : vector<1x8x512xf32> to vector<8x512xf32>
    %20 = arith.index_cast %c0_i32_1 : i32 to index
    %c64 = arith.constant 64 : index
    %c0_8 = arith.constant 0 : index
    %21 = vector.load %arg2[%20, %c64, %c0_8] : memref<1x96x512xf32, #tpu.memory_space<vmem>>, vector<1x8x512xf32>
    %22 = vector.shape_cast %21 : vector<1x8x512xf32> to vector<8x512xf32>
    %23 = arith.subf %16, %19 : vector<8x512xf32>
    %24 = arith.mulf %23, %23 : vector<8x512xf32>
    %25 = arith.divf %24, %22 : vector<8x512xf32>
    %26 = arith.index_cast %c0_i32_1 : i32 to index
    %c8 = arith.constant 8 : index
    %c0_9 = arith.constant 0 : index
    %27 = vector.load %arg2[%26, %c8, %c0_9] : memref<1x96x512xf32, #tpu.memory_space<vmem>>, vector<1x8x512xf32>
    %28 = vector.shape_cast %27 : vector<1x8x512xf32> to vector<8x512xf32>
    %29 = arith.index_cast %c0_i32_1 : i32 to index
    %c40 = arith.constant 40 : index
    %c0_10 = arith.constant 0 : index
    %30 = vector.load %arg2[%29, %c40, %c0_10] : memref<1x96x512xf32, #tpu.memory_space<vmem>>, vector<1x8x512xf32>
    %31 = vector.shape_cast %30 : vector<1x8x512xf32> to vector<8x512xf32>
    %32 = arith.index_cast %c0_i32_1 : i32 to index
    %c72 = arith.constant 72 : index
    %c0_11 = arith.constant 0 : index
    %33 = vector.load %arg2[%32, %c72, %c0_11] : memref<1x96x512xf32, #tpu.memory_space<vmem>>, vector<1x8x512xf32>
    %34 = vector.shape_cast %33 : vector<1x8x512xf32> to vector<8x512xf32>
    %35 = arith.subf %28, %31 : vector<8x512xf32>
    %36 = arith.mulf %35, %35 : vector<8x512xf32>
    %37 = arith.divf %36, %34 : vector<8x512xf32>
    %38 = arith.addf %25, %37 : vector<8x512xf32>
    %39 = arith.index_cast %c0_i32_1 : i32 to index
    %c16 = arith.constant 16 : index
    %c0_12 = arith.constant 0 : index
    %40 = vector.load %arg2[%39, %c16, %c0_12] : memref<1x96x512xf32, #tpu.memory_space<vmem>>, vector<1x8x512xf32>
    %41 = vector.shape_cast %40 : vector<1x8x512xf32> to vector<8x512xf32>
    %42 = arith.index_cast %c0_i32_1 : i32 to index
    %c48 = arith.constant 48 : index
    %c0_13 = arith.constant 0 : index
    %43 = vector.load %arg2[%42, %c48, %c0_13] : memref<1x96x512xf32, #tpu.memory_space<vmem>>, vector<1x8x512xf32>
    %44 = vector.shape_cast %43 : vector<1x8x512xf32> to vector<8x512xf32>
    %45 = arith.index_cast %c0_i32_1 : i32 to index
    %c80 = arith.constant 80 : index
    %c0_14 = arith.constant 0 : index
    %46 = vector.load %arg2[%45, %c80, %c0_14] : memref<1x96x512xf32, #tpu.memory_space<vmem>>, vector<1x8x512xf32>
    %47 = vector.shape_cast %46 : vector<1x8x512xf32> to vector<8x512xf32>
    %cst_15 = arith.constant 8.000000e-01 : f32
    %48 = vector.broadcast %cst_15 : f32 to vector<8x512xf32>
    %49 = arith.mulf %41, %48 : vector<8x512xf32>
    %cst_16 = arith.constant 5.000000e-01 : f32
    %50 = vector.broadcast %cst_16 : f32 to vector<8x512xf32>
    %51 = arith.addf %49, %50 : vector<8x512xf32>
    %cst_17 = arith.constant 2.30258512 : f32
    %52 = vector.broadcast %cst_17 : f32 to vector<8x512xf32>
    %53 = arith.mulf %51, %52 : vector<8x512xf32>
    %54 = math.exp %53 : vector<8x512xf32>
    %cst_18 = arith.constant 8.000000e-01 : f32
    %55 = vector.broadcast %cst_18 : f32 to vector<8x512xf32>
    %56 = arith.mulf %44, %55 : vector<8x512xf32>
    %cst_19 = arith.constant 5.000000e-01 : f32
    %57 = vector.broadcast %cst_19 : f32 to vector<8x512xf32>
    %58 = arith.addf %56, %57 : vector<8x512xf32>
    %cst_20 = arith.constant 2.30258512 : f32
    %59 = vector.broadcast %cst_20 : f32 to vector<8x512xf32>
    %60 = arith.mulf %58, %59 : vector<8x512xf32>
    %61 = math.exp %60 : vector<8x512xf32>
    %cst_21 = arith.constant 2.30258512 : f32
    %62 = vector.broadcast %cst_21 : f32 to vector<8x512xf32>
    %63 = arith.mulf %47, %62 : vector<8x512xf32>
    %64 = arith.mulf %63, %61 : vector<8x512xf32>
    %65 = math.absf %64 : vector<8x512xf32>
    %66 = arith.subf %54, %61 : vector<8x512xf32>
    %67 = arith.mulf %66, %66 : vector<8x512xf32>
    %68 = arith.divf %67, %65 : vector<8x512xf32>
    %69 = arith.addf %38, %68 : vector<8x512xf32>
    %70 = arith.index_cast %c0_i32_1 : i32 to index
    %c24 = arith.constant 24 : index
    %c0_22 = arith.constant 0 : index
    %71 = vector.load %arg2[%70, %c24, %c0_22] : memref<1x96x512xf32, #tpu.memory_space<vmem>>, vector<1x8x512xf32>
    %72 = vector.shape_cast %71 : vector<1x8x512xf32> to vector<8x512xf32>
    %73 = arith.index_cast %c0_i32_1 : i32 to index
    %c56 = arith.constant 56 : index
    %c0_23 = arith.constant 0 : index
    %74 = vector.load %arg2[%73, %c56, %c0_23] : memref<1x96x512xf32, #tpu.memory_space<vmem>>, vector<1x8x512xf32>
    %75 = vector.shape_cast %74 : vector<1x8x512xf32> to vector<8x512xf32>
    %76 = arith.index_cast %c0_i32_1 : i32 to index
    %c88 = arith.constant 88 : index
    %c0_24 = arith.constant 0 : index
    %77 = vector.load %arg2[%76, %c88, %c0_24] : memref<1x96x512xf32, #tpu.memory_space<vmem>>, vector<1x8x512xf32>
    %78 = vector.shape_cast %77 : vector<1x8x512xf32> to vector<8x512xf32>
    %79 = arith.subf %72, %75 : vector<8x512xf32>
    %80 = arith.mulf %79, %79 : vector<8x512xf32>
    %81 = arith.divf %80, %78 : vector<8x512xf32>
    %82 = arith.addf %69, %81 : vector<8x512xf32>
    %83 = arith.mulf %13, %82 : vector<8x512xf32>
    %84 = arith.addf %3, %83 : vector<8x512xf32>
    %c1_i32 = arith.constant 1 : i32
    %c0_25 = arith.constant 0 : index
    %c0_26 = arith.constant 0 : index
    %c0_27 = arith.constant 0 : index
    %85 = vector.load %arg4[%c0_25, %c0_26, %c0_27] : memref<1x8x512xf32, #tpu.memory_space<vmem>>, vector<1x8x512xf32>
    %86 = vector.shape_cast %84 : vector<8x512xf32> to vector<1x8x512xf32>
    %87 = arith.addf %85, %86 : vector<1x8x512xf32>
    %c0_28 = arith.constant 0 : index
    %c0_29 = arith.constant 0 : index
    %c0_30 = arith.constant 0 : index
    %88 = vector.load %arg4[%c0_28, %c0_29, %c0_30] : memref<1x8x512xf32, #tpu.memory_space<vmem>>, vector<1x8x512xf32>
    tpu.vector_store %arg4[%c0_28, %c0_29, %c0_30], %87 {strides = array<i32>} : memref<1x8x512xf32, #tpu.memory_space<vmem>>, vector<1x8x512xf32>,
    return
  }
  func.func @transform_0(%arg0: i32, %arg1: i32) -> (i32, i32, i32) {
    %c1_i32 = arith.constant 1 : i32
    %0 = arith.muli %arg0, %c1_i32 : i32
    %1 = arith.addi %0, %arg1 : i32
    %c0_i32 = arith.constant 0 : i32
    %c0_i32_0 = arith.constant 0 : i32
    %c0_i32_1 = arith.constant 0 : i32
    return %1, %c0_i32, %c0_i32_0 : i32, i32, i32
  }
  func.func @transform_1(%arg0: i32, %arg1: i32) -> (i32, i32, i32) {
    %c1_i32 = arith.constant 1 : i32
    %0 = arith.muli %arg0, %c1_i32 : i32
    %1 = arith.addi %0, %arg1 : i32
    %c0_i32 = arith.constant 0 : i32
    %c0_i32_0 = arith.constant 0 : i32
    %c0_i32_1 = arith.constant 0 : i32
    return %1, %c0_i32, %c0_i32_0 : i32, i32, i32
  }
  func.func @transform_2(%arg0: i32, %arg1: i32) -> (i32, i32, i32) {
    %c0_i32 = arith.constant 0 : i32
    %c0_i32_0 = arith.constant 0 : i32
    %c0_i32_1 = arith.constant 0 : i32
    return %arg0, %c0_i32, %c0_i32_0 : i32, i32, i32
  }
}

</mosaic_0001>

<llo_original>
// kernel: weighted_custom_exp_z_loss.1
$region0: #{weighted_custom_exp_z_loss.1}
  #allocation0 [shape = 'u32[]', space=smem, size = 0x4, offset = 0x4, fixed_abs, tag = 'smem constant byte address 0x4 - core index']
  #allocation1 [shape = 'u32[144,128]{1,0:T(1,128)}', space=vmem, size = 0x12000, scoped, tag = 'internal scratch']
  %s0 = inlined_call_operand.vmem [shape: f32[1,96,512], index: 0, kind: input, shape index: {}]
  %s1 = inlined_call_operand.vmem [shape: f32[1,8,512], index: 1, kind: input, shape index: {}]
  %s2 = inlined_call_operand.vmem [shape: f32[1,8,512], index: 2, kind: output, shape index: {}]
  %s3 = sld [smem:[#allocation0]]
  $region22: #{weighted_custom_exp_z_loss.1} parent=0
    _
  %s5 = ssub.s32 1, %s3
  %s6 = scalar_select 0, %s5, %s3
  // Predicated region
  $region2: #{weighted_custom_exp_z_loss.1} parent=0 // pred_check
    _
  $region3: #{weighted_custom_exp_z_loss.1} parent=0 // pred_check_branch
    %8 = sbr.rel (0) target = $region5
  $region4: #{weighted_custom_exp_z_loss.1} parent=0 // pred_region
    %s9 = sadd.s32 0, 0
    %p10 = scmp.lt.s32.totalorder %s9, 0
    %s11 = scalar_select %p10, %s9, 0
    %s12 = smul.addr %s11, 48
    %s13 = smul.addr %s12, 8
    %s14 = scalar_lea.vmem %s0, %s13
    %s15 = sadd.s32 0, 0
  $region5: #{weighted_custom_exp_z_loss.1} parent=0 // pred_fallthru
    _
  // Predicated region
  $region6: #{weighted_custom_exp_z_loss.1} parent=0 // pred_check
    _
  $region7: #{weighted_custom_exp_z_loss.1} parent=0 // pred_check_branch
    %17 = sbr.rel (0) target = $region9
  $region8: #{weighted_custom_exp_z_loss.1} parent=0 // pred_region
    %s18 = sadd.s32 0, 0
    %p19 = scmp.lt.s32.totalorder %s18, 0
    %s20 = scalar_select %p19, %s18, 0
    %s21 = smul.addr %s20, 4
    %s22 = smul.addr %s21, 8
    %s23 = scalar_lea.vmem %s1, %s22
    %s24 = sadd.s32 0, 0
  $region9: #{weighted_custom_exp_z_loss.1} parent=0 // pred_fallthru
    _
  %s25 = sadd.s32 0, 0
  %p26 = scmp.lt.s32.totalorder %s25, 0
  %s27 = scalar_select %p26, %s25, 0
  %s28 = smul.addr %s27, 48
  %s29 = smul.addr %s28, 8
  %s30 = scalar_lea.vmem %s0, %s29
  %s31 = sadd.s32 0, 0
  %p32 = scmp.lt.s32.totalorder %s31, 0
  %s33 = scalar_select %p32, %s31, 0
  %s34 = smul.addr %s33, 4
  %s35 = smul.addr %s34, 8
  %s36 = scalar_lea.vmem %s1, %s35
  %s37 = sadd.s32 0, 0
  %p38 = scmp.lt.s32.totalorder %s37, 0
  %s39 = scalar_select %p38, %s37, 0
  %s40 = smul.addr %s39, 48
  %s41 = smul.addr %s40, 8
  %s42 = scalar_lea.vmem %s0, %s41
  %s43 = sadd.s32 0, 0
  %s44 = sadd.s32 0, 0
  %p45 = scmp.lt.s32.totalorder %s44, 0
  %s46 = scalar_select %p45, %s44, 0
  %s47 = smul.addr %s46, 4
  %s48 = smul.addr %s47, 8
  %s49 = scalar_lea.vmem %s1, %s48
  %s50 = sadd.s32 0, 0
  %p51 = scmp.eq.s32.totalorder 0, 0
  // Predicated region
  $region10: #{weighted_custom_exp_z_loss.1} parent=0 // pred_check
    %p52 = pneg %p51
  $region11: #{weighted_custom_exp_z_loss.1} parent=0 // pred_check_branch
    %54 = sbr.rel (%p52) target = $region13
  $region12: #{weighted_custom_exp_z_loss.1} parent=0 // pred_region
    %55 = vst [vmem:[%s2] sm:$0xff] 0.0
    %56 = vst [vmem:[%s2 + $0x8] sm:$0xff] 0.0
    %57 = vst [vmem:[%s2 + $0x10] sm:$0xff] 0.0
    %58 = vst [vmem:[%s2 + $0x18] sm:$0xff] 0.0
  $region13: #{weighted_custom_exp_z_loss.1} parent=0 // pred_fallthru
    _
  %v59 = vld [vmem:[%s49] sm:$0xff]
  %v60 = vld [vmem:[%s49 + $0x8] sm:$0xff]
  %v61 = vld [vmem:[%s49 + $0x10] sm:$0xff]
  %v62 = vld [vmem:[%s49 + $0x18] sm:$0xff]
  %v63 = vsub.f32 1.0, %v59
  %v64 = vsub.f32 1.0, %v60
  %v65 = vsub.f32 1.0, %v61
  %v66 = vsub.f32 1.0, %v62
  %v67 = vrsqrt.pop %v63
  %v68 = vmul.f32 %v63, %v67
  %vm69 = vcmp.eq.f32.partialorder %v63, inf
  %v70 = vsel %vm69, %v63, %v68
  %vm71 = vcmp.eq.f32.partialorder %v63, 0.0
  %v72 = vand.u32 %v63, 2147483648
  %v73 = vsel %vm71, %v72, %v70
  %v74 = vrsqrt.pop %v64
  %v75 = vmul.f32 %v64, %v74
  %vm76 = vcmp.eq.f32.partialorder %v64, inf
  %v77 = vsel %vm76, %v64, %v75
  %vm78 = vcmp.eq.f32.partialorder %v64, 0.0
  %v79 = vand.u32 %v64, 2147483648
  %v80 = vsel %vm78, %v79, %v77
  %v81 = vrsqrt.pop %v65
  %v82 = vmul.f32 %v65, %v81
  %vm83 = vcmp.eq.f32.partialorder %v65, inf
  %v84 = vsel %vm83, %v65, %v82
  %vm85 = vcmp.eq.f32.partialorder %v65, 0.0
  %v86 = vand.u32 %v65, 2147483648
  %v87 = vsel %vm85, %v86, %v84
  %v88 = vrsqrt.pop %v66
  %v89 = vmul.f32 %v66, %v88
  %vm90 = vcmp.eq.f32.partialorder %v66, inf
  %v91 = vsel %vm90, %v66, %v89
  %vm92 = vcmp.eq.f32.partialorder %v66, 0.0
  %v93 = vand.u32 %v66, 2147483648
  %v94 = vsel %vm92, %v93, %v91
  %v95 = vmul.f32 %v73, %v63
  %v96 = vmul.f32 %v80, %v64
  %v97 = vmul.f32 %v87, %v65
  %v98 = vmul.f32 %v94, %v66
  %v99 = vmul.f32 %v95, %v63
  %v100 = vmul.f32 %v96, %v64
  %v101 = vmul.f32 %v97, %v65
  %v102 = vmul.f32 %v98, %v66
  %v103 = vadd.f32 %v99, 0.05
  %v104 = vadd.f32 %v100, 0.05
  %v105 = vadd.f32 %v101, 0.05
  %v106 = vadd.f32 %v102, 0.05
  %v107 = vld [vmem:[%s42] sm:$0xff]
  %v108 = vld [vmem:[%s42 + $0x8] sm:$0xff]
  %v109 = vld [vmem:[%s42 + $0x10] sm:$0xff]
  %v110 = vld [vmem:[%s42 + $0x18] sm:$0xff]
  %v111 = vld [vmem:[%s42 + $0x80] sm:$0xff]
  %v112 = vld [vmem:[%s42 + $0x88] sm:$0xff]
  %v113 = vld [vmem:[%s42 + $0x90] sm:$0xff]
  %v114 = vld [vmem:[%s42 + $0x98] sm:$0xff]
  %v115 = vld [vmem:[%s42 + $0x100] sm:$0xff]
  %v116 = vld [vmem:[%s42 + $0x108] sm:$0xff]
  %v117 = vld [vmem:[%s42 + $0x110] sm:$0xff]
  %v118 = vld [vmem:[%s42 + $0x118] sm:$0xff]
  %v119 = vsub.f32 %v107, %v111
  %v120 = vsub.f32 %v108, %v112
  %v121 = vsub.f32 %v109, %v113
  %v122 = vsub.f32 %v110, %v114
  %v123 = vmul.f32 %v119, %v119
  %v124 = vmul.f32 %v120, %v120
  %v125 = vmul.f32 %v121, %v121
  %v126 = vmul.f32 %v122, %v122
  %v127 = vrcp.pop %v115
  %v128 = vmul.f32 %v123, %v127
  %v129 = vrcp.pop %v116
  %v130 = vmul.f32 %v124, %v129
  %v131 = vrcp.pop %v117
  %v132 = vmul.f32 %v125, %v131
  %v133 = vrcp.pop %v118
  %v134 = vmul.f32 %v126, %v133
  %v135 = vld [vmem:[%s42 + $0x20] sm:$0xff]
  %v136 = vld [vmem:[%s42 + $0x28] sm:$0xff]
  %v137 = vld [vmem:[%s42 + $0x30] sm:$0xff]
  %v138 = vld [vmem:[%s42 + $0x38] sm:$0xff]
  %v139 = vld [vmem:[%s42 + $0xa0] sm:$0xff]
  %v140 = vld [vmem:[%s42 + $0xa8] sm:$0xff]
  %v141 = vld [vmem:[%s42 + $0xb0] sm:$0xff]
  %v142 = vld [vmem:[%s42 + $0xb8] sm:$0xff]
  %v143 = vld [vmem:[%s42 + $0x120] sm:$0xff]
  %v144 = vld [vmem:[%s42 + $0x128] sm:$0xff]
  %v145 = vld [vmem:[%s42 + $0x130] sm:$0xff]
  %v146 = vld [vmem:[%s42 + $0x138] sm:$0xff]
  %v147 = vsub.f32 %v135, %v139
  %v148 = vsub.f32 %v136, %v140
  %v149 = vsub.f32 %v137, %v141
  %v150 = vsub.f32 %v138, %v142
  %v151 = vmul.f32 %v147, %v147
  %v152 = vmul.f32 %v148, %v148
  %v153 = vmul.f32 %v149, %v149
  %v154 = vmul.f32 %v150, %v150
  %v155 = vrcp.pop %v143
  %v156 = vmul.f32 %v151, %v155
  %v157 = vrcp.pop %v144
  %v158 = vmul.f32 %v152, %v157
  %v159 = vrcp.pop %v145
  %v160 = vmul.f32 %v153, %v159
  %v161 = vrcp.pop %v146
  %v162 = vmul.f32 %v154, %v161
  %v163 = vadd.f32 %v128, %v156
  %v164 = vadd.f32 %v130, %v158
  %v165 = vadd.f32 %v132, %v160
  %v166 = vadd.f32 %v134, %v162
  %v167 = vld [vmem:[%s42 + $0x40] sm:$0xff]
  %v168 = vld [vmem:[%s42 + $0x48] sm:$0xff]
  %v169 = vld [vmem:[%s42 + $0x50] sm:$0xff]
  %v170 = vld [vmem:[%s42 + $0x58] sm:$0xff]
  %v171 = vld [vmem:[%s42 + $0xc0] sm:$0xff]
  %v172 = vld [vmem:[%s42 + $0xc8] sm:$0xff]
  %v173 = vld [vmem:[%s42 + $0xd0] sm:$0xff]
  %v174 = vld [vmem:[%s42 + $0xd8] sm:$0xff]
  %v175 = vld [vmem:[%s42 + $0x140] sm:$0xff]
  %v176 = vld [vmem:[%s42 + $0x148] sm:$0xff]
  %v177 = vld [vmem:[%s42 + $0x150] sm:$0xff]
  %v178 = vld [vmem:[%s42 + $0x158] sm:$0xff]
  %v179 = vmul.f32 %v167, 0.8
  %v180 = vmul.f32 %v168, 0.8
  %v181 = vmul.f32 %v169, 0.8
  %v182 = vmul.f32 %v170, 0.8
  %v183 = vadd.f32 %v179, 0.5
  %v184 = vadd.f32 %v180, 0.5
  %v185 = vadd.f32 %v181, 0.5
  %v186 = vadd.f32 %v182, 0.5
  %v187 = vmul.f32 %v183, 2.3025851
  %v188 = vmul.f32 %v184, 2.3025851
  %v189 = vmul.f32 %v185, 2.3025851
  %v190 = vmul.f32 %v186, 2.3025851
  %v191 = vmul.f32 %v187, 1.442695
  %v192 = vpow.pop %v191
  %v193 = vmul.f32 %v188, 1.442695
  %v194 = vpow.pop %v193
  %v195 = vmul.f32 %v189, 1.442695
  %v196 = vpow.pop %v195
  %v197 = vmul.f32 %v190, 1.442695
  %v198 = vpow.pop %v197
  %v199 = vmul.f32 %v171, 0.8
  %v200 = vmul.f32 %v172, 0.8
  %v201 = vmul.f32 %v173, 0.8
  %v202 = vmul.f32 %v174, 0.8
  %v203 = vadd.f32 %v199, 0.5
  %v204 = vadd.f32 %v200, 0.5
  %v205 = vadd.f32 %v201, 0.5
  %v206 = vadd.f32 %v202, 0.5
  %v207 = vmul.f32 %v203, 2.3025851
  %v208 = vmul.f32 %v204, 2.3025851
  %v209 = vmul.f32 %v205, 2.3025851
  %v210 = vmul.f32 %v206, 2.3025851
  %v211 = vmul.f32 %v207, 1.442695
  %v212 = vpow.pop %v211
  %v213 = vmul.f32 %v208, 1.442695
  %v214 = vpow.pop %v213
  %v215 = vmul.f32 %v209, 1.442695
  %v216 = vpow.pop %v215
  %v217 = vmul.f32 %v210, 1.442695
  %v218 = vpow.pop %v217
  %v219 = vmul.f32 %v175, 2.3025851
  %v220 = vmul.f32 %v176, 2.3025851
  %v221 = vmul.f32 %v177, 2.3025851
  %v222 = vmul.f32 %v178, 2.3025851
  %v223 = vmul.f32 %v219, %v212
  %v224 = vmul.f32 %v220, %v214
  %v225 = vmul.f32 %v221, %v216
  %v226 = vmul.f32 %v222, %v218
  %v227 = vand.u32 2147483647, %v223
  %v228 = vand.u32 2147483647, %v224
  %v229 = vand.u32 2147483647, %v225
  %v230 = vand.u32 2147483647, %v226
  %v231 = vsub.f32 %v192, %v212
  %v232 = vsub.f32 %v194, %v214
  %v233 = vsub.f32 %v196, %v216
  %v234 = vsub.f32 %v198, %v218
  %v235 = vmul.f32 %v231, %v231
  %v236 = vmul.f32 %v232, %v232
  %v237 = vmul.f32 %v233, %v233
  %v238 = vmul.f32 %v234, %v234
  %v239 = vrcp.pop %v227
  %v240 = vmul.f32 %v235, %v239
  %v241 = vrcp.pop %v228
  %v242 = vmul.f32 %v236, %v241
  %v243 = vrcp.pop %v229
  %v244 = vmul.f32 %v237, %v243
  %v245 = vrcp.pop %v230
  %v246 = vmul.f32 %v238, %v245
  %v247 = vadd.f32 %v163, %v240
  %v248 = vadd.f32 %v164, %v242
  %v249 = vadd.f32 %v165, %v244
  %v250 = vadd.f32 %v166, %v246
  %v251 = vld [vmem:[%s42 + $0x60] sm:$0xff]
  %v252 = vld [vmem:[%s42 + $0x68] sm:$0xff]
  %v253 = vld [vmem:[%s42 + $0x70] sm:$0xff]
  %v254 = vld [vmem:[%s42 + $0x78] sm:$0xff]
  %v255 = vld [vmem:[%s42 + $0xe0] sm:$0xff]
  %v256 = vld [vmem:[%s42 + $0xe8] sm:$0xff]
  %v257 = vld [vmem:[%s42 + $0xf0] sm:$0xff]
  %v258 = vld [vmem:[%s42 + $0xf8] sm:$0xff]
  %v259 = vld [vmem:[%s42 + $0x160] sm:$0xff]
  %v260 = vld [vmem:[%s42 + $0x168] sm:$0xff]
  %v261 = vld [vmem:[%s42 + $0x170] sm:$0xff]
  %v262 = vld [vmem:[%s42 + $0x178] sm:$0xff]
  %v263 = vsub.f32 %v251, %v255
  %v264 = vsub.f32 %v252, %v256
  %v265 = vsub.f32 %v253, %v257
  %v266 = vsub.f32 %v254, %v258
  %v267 = vmul.f32 %v263, %v263
  %v268 = vmul.f32 %v264, %v264
  %v269 = vmul.f32 %v265, %v265
  %v270 = vmul.f32 %v266, %v266
  %v271 = vrcp.pop %v259
  %v272 = vmul.f32 %v267, %v271
  %v273 = vrcp.pop %v260
  %v274 = vmul.f32 %v268, %v273
  %v275 = vrcp.pop %v261
  %v276 = vmul.f32 %v269, %v275
  %v277 = vrcp.pop %v262
  %v278 = vmul.f32 %v270, %v277
  %v279 = vadd.f32 %v247, %v272
  %v280 = vadd.f32 %v248, %v274
  %v281 = vadd.f32 %v249, %v276
  %v282 = vadd.f32 %v250, %v278
  %v283 = vmul.f32 %v103, %v279
  %v284 = vmul.f32 %v104, %v280
  %v285 = vmul.f32 %v105, %v281
  %v286 = vmul.f32 %v106, %v282
  %v287 = vadd.f32 %v283, 0.0
  %v288 = vadd.f32 %v284, 0.0
  %v289 = vadd.f32 %v285, 0.0
  %v290 = vadd.f32 %v286, 0.0
  %v291 = vld [vmem:[%s2] sm:$0xff]
  %v292 = vld [vmem:[%s2 + $0x8] sm:$0xff]
  %v293 = vld [vmem:[%s2 + $0x10] sm:$0xff]
  %v294 = vld [vmem:[%s2 + $0x18] sm:$0xff]
  %v295 = vadd.f32 %v291, %v287
  %v296 = vadd.f32 %v292, %v288
  %v297 = vadd.f32 %v293, %v289
  %v298 = vadd.f32 %v294, %v290
  %299 = vst [vmem:[%s2] sm:$0xff] %v295
  %300 = vst [vmem:[%s2 + $0x8] sm:$0xff] %v296
  %301 = vst [vmem:[%s2 + $0x10] sm:$0xff] %v297
  %302 = vst [vmem:[%s2 + $0x18] sm:$0xff] %v298
  // Predicated region
  $region14: #{weighted_custom_exp_z_loss.1} parent=0 // pred_check
    _
  $region15: #{weighted_custom_exp_z_loss.1} parent=0 // pred_check_branch
    %304 = sbr.rel (0) target = $region17
  $region16: #{weighted_custom_exp_z_loss.1} parent=0 // pred_region
    _
  $region17: #{weighted_custom_exp_z_loss.1} parent=0 // pred_fallthru
    _
  // Predicated region
  $region18: #{weighted_custom_exp_z_loss.1} parent=0 // pred_check
    _
  $region19: #{weighted_custom_exp_z_loss.1} parent=0 // pred_check_branch
    %306 = sbr.rel (0) target = $region21
  $region20: #{weighted_custom_exp_z_loss.1} parent=0 // pred_region
    _
  $region21: #{weighted_custom_exp_z_loss.1} parent=0 // pred_fallthru
    _

</llo_original>
